<compile_context>
chip_gen: v6e
topology: v6e:2x2x1
jax: 0.10.0
libtpu: 0.0.40
codegen_flags: <defaults>
</compile_context>

<pallas_src>
import functools

import jax
import jax.numpy as jnp
from jax.experimental import pallas as pl
from jax.experimental.pallas import tpu as pltpu

_EPS = 1e-5  # PyTorch BatchNorm2d default eps

# f32 keeps ~1e-5 parity with the f32 PyTorch/JAX reference (checked at 1e-4 below).
# Per the perf review, switch to jnp.bfloat16 on v5e/v6e/v7x to halve patch DMA
# bytes and run the MXU at full bf16 rate (BN stats / normalize stay f32 in-kernel
# regardless); expect ~1e-3..1e-2 relative error vs an f32 reference in that mode.
_MXU_DTYPE = jnp.float32

_ACTIVATIONS = {
    "relu": lambda y: jnp.maximum(y, 0.0),
    "leaky": lambda y: jnp.where(y >= 0.0, y, 0.01 * y),   # nn.LeakyReLU default slope
    "tanh": jnp.tanh,
    "gelu": lambda y: jax.nn.gelu(y, approximate=False),   # nn.GELU default (erf)
    "silu": lambda y: y * jax.nn.sigmoid(y),
}


def _round_up(x, m):
    return (x + m - 1) // m * m


def _conv_bn_act_kernel(patches_ref, w_ref, gamma_ref, beta_ref, out_ref,
                        sum_sc, ssq_sc, scale_sc, shift_sc,
                        *, act_fn, inv_m, eps):
    """Fused conv-matmul + two-pass tiled BatchNorm + activation.

    Grid = (bn_pass, m_tile); the m-tile axis is innermost.
      pass 0: accumulate per-channel sum / sum-of-squares of y over all M tiles.
      pass 1: fold the moments into a single per-channel scale/shift, recompute
              the conv tile on the MXU and store act(y*scale + shift) lane-dense.

    patches_ref: [K_pad, TM]       im2col patches, transposed (M on the lane axis)
    w_ref:       [Cout_pad, K_pad]
    gamma_ref, beta_ref: [Cout_pad, 1]
    out_ref:     [Cout_pad, TM] f32
    *_sc:        [Cout_pad, 1] f32 VMEM scratch persisting across the grid
    """
    p = pl.program_id(0)
    m = pl.program_id(1)

    # Conv hot path on the MXU, f32 accumulation.
    y = jnp.dot(w_ref[...], patches_ref[...], preferred_element_type=jnp.float32)

    @pl.when((p == 0) & (m == 0))
    def _init():
        sum_sc[...] = jnp.zeros_like(sum_sc)
        ssq_sc[...] = jnp.zeros_like(ssq_sc)

    @pl.when(p == 0)
    def _accumulate_moments():
        # Zero-padded M columns contribute 0 to both sums (there is no conv bias),
        # so the statistics only see real samples; we divide by the real M below.
        sum_sc[...] += jnp.sum(y, axis=1, keepdims=True)
        ssq_sc[...] += jnp.sum(y * y, axis=1, keepdims=True)

    @pl.when((p == 1) & (m == 0))
    def _finalize_stats():
        mean = sum_sc[...] * inv_m
        # Biased variance (training-mode BatchNorm2d), single-pass moments.
        var = jnp.maximum(ssq_sc[...] * inv_m - mean * mean, 0.0)
        inv_std = jax.lax.rsqrt(var + eps)
        scale = gamma_ref[...] * inv_std
        scale_sc[...] = scale
        shift_sc[...] = beta_ref[...] - mean * scale

    @pl.when(p == 1)
    def _normalize_activate():
        out_ref[...] = act_fn(y * scale_sc[...] + shift_sc[...]).astype(out_ref.dtype)


def _im2col_T(x_cnhw, k, s):
    """x: [Cin, N, H, W] (channel-major), padding=1.

    Returns (patchesT [K, M], Hout, Wout) with K = Cin*k*k ordered (cin, kh, kw)
    to match PyTorch's Conv2d weight layout, and M = N*Hout*Wout ordered (n, ho, wo).
    """
    c, n, h, w = x_cnhw.shape
    xp = jnp.pad(x_cnhw, ((0, 0), (0, 0), (1, 1), (1, 1)))
    hout = (h + 2 - k) // s + 1
    wout = (w + 2 - k) // s + 1
    taps = []
    for kh in range(k):
        for kw in range(k):
            taps.append(xp[:, :, kh:kh + hout * s:s, kw:kw + wout * s:s])  # [C,N,Hout,Wout]
    pat = jnp.stack(taps, axis=1)                         # [C, k*k, N, Hout, Wout]
    return pat.reshape(c * k * k, n * hout * wout), hout, wout


def conv_bn_act(x_cnhw, weight, gamma, beta, stride, act_name, mxu_dtype=_MXU_DTYPE):
    """One encoder block on a channel-major [Cin, N, H, W] activation.

    Returns the next activation in the same channel-major layout [Cout, N, Hout, Wout].
    weight: [Cout, Cin, k, k] (PyTorch layout).
    """
    cout, cin, k, _ = weight.shape
    c, n, h, w = x_cnhw.shape
    assert c == cin, (c, cin)

    # TODO(synk): build patches in-kernel (KH*KW shifted partial matmuls on a DMA'd
    # input tile) to remove the KH*KW-fold im2col expansion that XLA materializes.
    patches, hout, wout = _im2col_T(x_cnhw, k, stride)     # [K, M]
    kdim, m = patches.shape

    cout_p = _round_up(cout, 8)
    k_pad = _round_up(kdim, 8)

    # Tile the lane (M) axis; keep double-buffered patch+output tiles under ~8 MiB
    # so the kernel fits every generation's scoped-VMEM default with headroom.
    itemsize = jnp.dtype(mxu_dtype).itemsize
    per_col = 2 * (k_pad * itemsize + cout_p * 4)          # double-buffered bytes / column
    tm = min(_round_up(m, 128), 2048)
    tm = min(tm, max(128, (8 * 1024 * 1024 // per_col) // 128 * 128))
    m_pad = _round_up(m, tm)
    n_m = m_pad // tm

    patches_p = jnp.pad(patches, ((0, k_pad - kdim), (0, m_pad - m))).astype(mxu_dtype)
    w_p = jnp.pad(weight.reshape(cout, kdim),
                  ((0, cout_p - cout), (0, k_pad - kdim))).astype(mxu_dtype)
    gamma_p = jnp.pad(gamma.astype(jnp.float32), (0, cout_p - cout),
                      constant_values=1.0).reshape(cout_p, 1)
    beta_p = jnp.pad(beta.astype(jnp.float32), (0, cout_p - cout)).reshape(cout_p, 1)

    kernel = functools.partial(_conv_bn_act_kernel,
                               act_fn=_ACTIVATIONS[act_name],
                               inv_m=1.0 / float(m), eps=_EPS)

    out = pl.pallas_call(
        kernel,
        out_shape=jax.ShapeDtypeStruct((cout_p, m_pad), jnp.float32),
        grid_spec=pltpu.PrefetchScalarGridSpec(
            num_scalar_prefetch=0,
            grid=(2, n_m),                                        # (BN pass, M tile)
            in_specs=[
                pl.BlockSpec((k_pad, tm), lambda p, i: (0, i)),       # patchesT tile
                pl.BlockSpec((cout_p, k_pad), lambda p, i: (0, 0)),   # weights (VMEM-resident)
                pl.BlockSpec((cout_p, 1), lambda p, i: (0, 0)),       # gamma
                pl.BlockSpec((cout_p, 1), lambda p, i: (0, 0)),       # beta
            ],
            out_specs=pl.BlockSpec((cout_p, tm), lambda p, i: (0, i)),
            scratch_shapes=[
                pltpu.VMEM((cout_p, 1), jnp.float32),   # running per-channel sum
                pltpu.VMEM((cout_p, 1), jnp.float32),   # running per-channel sum of squares
                pltpu.VMEM((cout_p, 1), jnp.float32),   # folded scale = gamma * rsqrt(var+eps)
                pltpu.VMEM((cout_p, 1), jnp.float32),   # folded shift = beta - mean * scale
            ],
        ),
        compiler_params=pltpu.CompilerParams(
            # Both axes carry VMEM-scratch state (moment accumulation, folded
            # scale/shift), so they must iterate sequentially on one core.
            dimension_semantics=("arbitrary", "arbitrary"),
            vmem_limit_bytes=32 * 1024 * 1024,
        ),
    )(patches_p, w_p, gamma_p, beta_p)

    # Lane-dense [Cout, M] result is already the next layer's channel-major layout.
    return out[:cout, :m].reshape(cout, n, hout, wout)


def encoder_forward(x_nchw, params, config, mxu_dtype=_MXU_DTYPE):
    out = jnp.transpose(x_nchw, (1, 0, 2, 3))      # NCHW -> CNHW, once
    for i, (wt, _bias, gamma, beta) in enumerate(params):
        # The Conv2d bias is exactly cancelled by BatchNorm's mean subtraction -> dropped.
        out = conv_bn_act(out, wt, gamma, beta,
                          stride=config["conv_kernel_strides"][i],
                          act_name=config["conv_activation_fn"],
                          mxu_dtype=mxu_dtype)
    return jnp.transpose(out, (1, 0, 2, 3))        # CNHW -> NCHW, once


def init_encoder_params(key, config):
    """Deterministic parameter init (shapes follow the PyTorch module __init__)."""
    params = []
    channels = config["convbn_channels"]
    for i in range(config["convbn_blocks"]):
        k = config["conv_kernel_size"][i]
        cin, cout = channels[i], channels[i + 1]
        key, kw_key, kb_key, kg_key, kbe_key = jax.random.split(key, 5)
        fan_in = cin * k * k
        bound = 1.0 / (fan_in ** 0.5)
        w = jax.random.uniform(kw_key, (cout, cin, k, k), jnp.float32, -bound, bound)
        b = jax.random.uniform(kb_key, (cout,), jnp.float32, -bound, bound)
        gamma = jnp.ones((cout,), jnp.float32) + 0.1 * jax.random.normal(kg_key, (cout,))
        beta = 0.1 * jax.random.normal(kbe_key, (cout,))
        params.append((w, b, gamma, beta))
    return params


def encoder_reference(x, params, config):
    """Pure-JAX reference (no Pallas), with the conv bias included, in NCHW."""
    out = x
    act = _ACTIVATIONS[config["conv_activation_fn"]]
    for i, (w, b, gamma, beta) in enumerate(params):
        s = config["conv_kernel_strides"][i]
        y = jax.lax.conv_general_dilated(
            out, w, (s, s), ((1, 1), (1, 1)),
            dimension_numbers=("NCHW", "OIHW", "NCHW"))
        y = y + b[None, :, None, None]
        mean = jnp.mean(y, axis=(0, 2, 3), keepdims=True)
        var = jnp.mean(jnp.square(y - mean), axis=(0, 2, 3), keepdims=True)
        y = (y - mean) * jax.lax.rsqrt(var + _EPS)
        y = y * gamma[None, :, None, None] + beta[None, :, None, None]
        out = act(y)
    return out


if __name__ == "__main__":
    config = {
        "convbn_blocks": 2,
        "convbn_channels": [4, 8, 16],
        "conv_kernel_size": [3, 3],
        "conv_kernel_strides": [2, 1],
        "conv_activation_fn": "relu",
        "latent_dim": 32,  # stored by the module but unused in forward()
    }

    key = jax.random.PRNGKey(0)
    key, x_key, p_key = jax.random.split(key, 3)
    x = jax.random.normal(x_key, (2, 4, 16, 16), dtype=jnp.float32)  # NCHW
    params = init_encoder_params(p_key, config)

    fwd = jax.jit(lambda xx, pp: encoder_forward(xx, pp, config))
    out = jax.block_until_ready(fwd(x, params))

    ref = jax.block_until_ready(encoder_reference(x, params, config))
    assert out.shape == ref.shape, (out.shape, ref.shape)
    assert jnp.allclose(out, ref, atol=1e-4, rtol=1e-4), "Pallas output mismatch vs JAX reference"

    print("KERNEL_OK")
</pallas_src>

<mosaic_0001>
module attributes {stable_mosaic.version = 11 : i64} {
  func.func @_conv_bn_act_kernel(%arg0: i32, %arg1: i32, %arg2: memref<40x128xf32, #tpu.memory_space<vmem>>, %arg3: memref<8x40xf32, #tpu.memory_space<vmem>>, %arg4: memref<8x1xf32, #tpu.memory_space<vmem>>, %arg5: memref<8x1xf32, #tpu.memory_space<vmem>>, %arg6: memref<8x128xf32, #tpu.memory_space<vmem>>, %arg7: memref<8x1xf32, #tpu.memory_space<vmem>>, %arg8: memref<8x1xf32, #tpu.memory_space<vmem>>, %arg9: memref<8x1xf32, #tpu.memory_space<vmem>>, %arg10: memref<8x1xf32, #tpu.memory_space<vmem>>) attributes {dimension_semantics = [#tpu.dimension_semantics<arbitrary>, #tpu.dimension_semantics<arbitrary>], iteration_bounds = array<i64: 2, 1>, scalar_prefetch = 0 : i64, scratch_operands = 4 : i64, tpu.core_type = #tpu.core_type<tc>, window_params = [{transform_indices = @transform_0, window_bounds = array<i64: 40, 128>}, {pipeline_mode = #tpu.pipeline_mode<synchronous>, transform_indices = @transform_1, window_bounds = array<i64: 8, 40>}, {pipeline_mode = #tpu.pipeline_mode<synchronous>, transform_indices = @transform_2, window_bounds = array<i64: 8, 1>}, {pipeline_mode = #tpu.pipeline_mode<synchronous>, transform_indices = @transform_3, window_bounds = array<i64: 8, 1>}, {transform_indices = @transform_4, window_bounds = array<i64: 8, 128>}]} {
    %c0 = arith.constant 0 : index
    %c0_0 = arith.constant 0 : index
    %0 = vector.load %arg3[%c0, %c0_0] : memref<8x40xf32, #tpu.memory_space<vmem>>, vector<8x40xf32>
    %c0_1 = arith.constant 0 : index
    %c0_2 = arith.constant 0 : index
    %1 = vector.load %arg2[%c0_1, %c0_2] : memref<40x128xf32, #tpu.memory_space<vmem>>, vector<40x128xf32>
    %cst = arith.constant dense<0.000000e+00> : vector<8x128xf32>
    %2 = tpu.matmul %0, %1, %cst {dimension_numbers = #tpu.dot_dimension_numbers<[1], [0], [0], [1], [0, 0, 1, 1], [], []>} : vector<8x40xf32>, vector<40x128xf32>, vector<8x128xf32> -> vector<8x128xf32>
    %c0_i32 = arith.constant 0 : i32
    %3 = arith.cmpi eq, %arg0, %c0_i32 : i32
    %c0_i32_3 = arith.constant 0 : i32
    %4 = arith.cmpi eq, %arg1, %c0_i32_3 : i32
    %5 = arith.andi %3, %4 : i1
    %6 = arith.extui %5 : i1 to i32
    %c0_i32_4 = arith.constant 0 : i32
    %7 = arith.cmpi ne, %6, %c0_i32_4 : i32
    scf.if %7 {
      %cst_11 = arith.constant 0.000000e+00 : f32
      %19 = vector.broadcast %cst_11 : f32 to vector<8x1xf32>
      %c0_12 = arith.constant 0 : index
      %c0_13 = arith.constant 0 : index
      %20 = vector.load %arg7[%c0_12, %c0_13] : memref<8x1xf32, #tpu.memory_space<vmem>>, vector<8x1xf32>
      tpu.vector_store %arg7[%c0_12, %c0_13], %19 {strides = array<i32>} : memref<8x1xf32, #tpu.memory_space<vmem>>, vector<8x1xf32>,
      %cst_14 = arith.constant 0.000000e+00 : f32
      %21 = vector.broadcast %cst_14 : f32 to vector<8x1xf32>
      %c0_15 = arith.constant 0 : index
      %c0_16 = arith.constant 0 : index
      %22 = vector.load %arg8[%c0_15, %c0_16] : memref<8x1xf32, #tpu.memory_space<vmem>>, vector<8x1xf32>
      tpu.vector_store %arg8[%c0_15, %c0_16], %21 {strides = array<i32>} : memref<8x1xf32, #tpu.memory_space<vmem>>, vector<8x1xf32>,
    } else {
    }
    %c0_i32_5 = arith.constant 0 : i32
    %8 = arith.cmpi eq, %arg0, %c0_i32_5 : i32
    %9 = arith.extui %8 : i1 to i32
    %c0_i32_6 = arith.constant 0 : i32
    %10 = arith.cmpi ne, %9, %c0_i32_6 : i32
    scf.if %10 {
      %c0_11 = arith.constant 0 : index
      %c0_12 = arith.constant 0 : index
      %19 = vector.load %arg7[%c0_11, %c0_12] : memref<8x1xf32, #tpu.memory_space<vmem>>, vector<8x1xf32>
      %cst_13 = arith.constant dense<0.000000e+00> : vector<8xf32>
      %20 = vector.multi_reduction <add>, %2, %cst_13 [1] : vector<8x128xf32> to vector<8xf32>
      %21 = vector.shape_cast %20 : vector<8xf32> to vector<8x1xf32>
      %22 = arith.addf %19, %21 : vector<8x1xf32>
      %c0_14 = arith.constant 0 : index
      %c0_15 = arith.constant 0 : index
      %23 = vector.load %arg7[%c0_14, %c0_15] : memref<8x1xf32, #tpu.memory_space<vmem>>, vector<8x1xf32>
      tpu.vector_store %arg7[%c0_14, %c0_15], %22 {strides = array<i32>} : memref<8x1xf32, #tpu.memory_space<vmem>>, vector<8x1xf32>,
      %c0_16 = arith.constant 0 : index
      %c0_17 = arith.constant 0 : index
      %24 = vector.load %arg8[%c0_16, %c0_17] : memref<8x1xf32, #tpu.memory_space<vmem>>, vector<8x1xf32>
      %25 = arith.mulf %2, %2 : vector<8x128xf32>
      %cst_18 = arith.constant dense<0.000000e+00> : vector<8xf32>
      %26 = vector.multi_reduction <add>, %25, %cst_18 [1] : vector<8x128xf32> to vector<8xf32>
      %27 = vector.shape_cast %26 : vector<8xf32> to vector<8x1xf32>
      %28 = arith.addf %24, %27 : vector<8x1xf32>
      %c0_19 = arith.constant 0 : index
      %c0_20 = arith.constant 0 : index
      %29 = vector.load %arg8[%c0_19, %c0_20] : memref<8x1xf32, #tpu.memory_space<vmem>>, vector<8x1xf32>
      tpu.vector_store %arg8[%c0_19, %c0_20], %28 {strides = array<i32>} : memref<8x1xf32, #tpu.memory_space<vmem>>, vector<8x1xf32>,
    } else {
    }
    %c1_i32 = arith.constant 1 : i32
    %11 = arith.cmpi eq, %arg0, %c1_i32 : i32
    %c0_i32_7 = arith.constant 0 : i32
    %12 = arith.cmpi eq, %arg1, %c0_i32_7 : i32
    %13 = arith.andi %11, %12 : i1
    %14 = arith.extui %13 : i1 to i32
    %c0_i32_8 = arith.constant 0 : i32
    %15 = arith.cmpi ne, %14, %c0_i32_8 : i32
    scf.if %15 {
      %c0_11 = arith.constant 0 : index
      %c0_12 = arith.constant 0 : index
      %19 = vector.load %arg7[%c0_11, %c0_12] : memref<8x1xf32, #tpu.memory_space<vmem>>, vector<8x1xf32>
      %cst_13 = arith.constant 7.812500e-03 : f32
      %20 = vector.broadcast %cst_13 : f32 to vector<8x1xf32>
      %21 = arith.mulf %19, %20 : vector<8x1xf32>
      %c0_14 = arith.constant 0 : index
      %c0_15 = arith.constant 0 : index
      %22 = vector.load %arg8[%c0_14, %c0_15] : memref<8x1xf32, #tpu.memory_space<vmem>>, vector<8x1xf32>
      %cst_16 = arith.constant 7.812500e-03 : f32
      %23 = vector.broadcast %cst_16 : f32 to vector<8x1xf32>
      %24 = arith.mulf %22, %23 : vector<8x1xf32>
      %25 = arith.mulf %21, %21 : vector<8x1xf32>
      %26 = arith.subf %24, %25 : vector<8x1xf32>
      %cst_17 = arith.constant 0.000000e+00 : f32
      %27 = vector.broadcast %cst_17 : f32 to vector<8x1xf32>
      %28 = arith.maximumf %26, %27 : vector<8x1xf32>
      %cst_18 = arith.constant 9.99999974E-6 : f32
      %29 = vector.broadcast %cst_18 : f32 to vector<8x1xf32>
      %30 = arith.addf %28, %29 : vector<8x1xf32>
      %31 = math.rsqrt %30 : vector<8x1xf32>
      %c0_19 = arith.constant 0 : index
      %c0_20 = arith.constant 0 : index
      %32 = vector.load %arg4[%c0_19, %c0_20] : memref<8x1xf32, #tpu.memory_space<vmem>>, vector<8x1xf32>
      %33 = arith.mulf %32, %31 : vector<8x1xf32>
      %c0_21 = arith.constant 0 : index
      %c0_22 = arith.constant 0 : index
      %34 = vector.load %arg9[%c0_21, %c0_22] : memref<8x1xf32, #tpu.memory_space<vmem>>, vector<8x1xf32>
      tpu.vector_store %arg9[%c0_21, %c0_22], %33 {strides = array<i32>} : memref<8x1xf32, #tpu.memory_space<vmem>>, vector<8x1xf32>,
      %c0_23 = arith.constant 0 : index
      %c0_24 = arith.constant 0 : index
      %35 = vector.load %arg5[%c0_23, %c0_24] : memref<8x1xf32, #tpu.memory_space<vmem>>, vector<8x1xf32>
      %36 = arith.mulf %21, %33 : vector<8x1xf32>
      %37 = arith.subf %35, %36 : vector<8x1xf32>
      %c0_25 = arith.constant 0 : index
      %c0_26 = arith.constant 0 : index
      %38 = vector.load %arg10[%c0_25, %c0_26] : memref<8x1xf32, #tpu.memory_space<vmem>>, vector<8x1xf32>
      tpu.vector_store %arg10[%c0_25, %c0_26], %37 {strides = array<i32>} : memref<8x1xf32, #tpu.memory_space<vmem>>, vector<8x1xf32>,
    } else {
    }
    %c1_i32_9 = arith.constant 1 : i32
    %16 = arith.cmpi eq, %arg0, %c1_i32_9 : i32
    %17 = arith.extui %16 : i1 to i32
    %c0_i32_10 = arith.constant 0 : i32
    %18 = arith.cmpi ne, %17, %c0_i32_10 : i32
    scf.if %18 {
      %c0_11 = arith.constant 0 : index
      %c0_12 = arith.constant 0 : index
      %19 = vector.load %arg9[%c0_11, %c0_12] : memref<8x1xf32, #tpu.memory_space<vmem>>, vector<8x1xf32>
      %20 = vector.broadcast %19 : vector<8x1xf32> to vector<8x128xf32>
      %21 = arith.mulf %2, %20 : vector<8x128xf32>
      %c0_13 = arith.constant 0 : index
      %c0_14 = arith.constant 0 : index
      %22 = vector.load %arg10[%c0_13, %c0_14] : memref<8x1xf32, #tpu.memory_space<vmem>>, vector<8x1xf32>
      %23 = vector.broadcast %22 : vector<8x1xf32> to vector<8x128xf32>
      %24 = arith.addf %21, %23 : vector<8x128xf32>
      %cst_15 = arith.constant 0.000000e+00 : f32
      %25 = vector.broadcast %cst_15 : f32 to vector<8x128xf32>
      %26 = arith.maximumf %24, %25 : vector<8x128xf32>
      %c0_16 = arith.constant 0 : index
      %c0_17 = arith.constant 0 : index
      %27 = vector.load %arg6[%c0_16, %c0_17] : memref<8x128xf32, #tpu.memory_space<vmem>>, vector<8x128xf32>
      tpu.vector_store %arg6[%c0_16, %c0_17], %26 {strides = array<i32>} : memref<8x128xf32, #tpu.memory_space<vmem>>, vector<8x128xf32>,
    } else {
    }
    return
  }
  func.func @transform_0(%arg0: i32, %arg1: i32) -> (i32, i32) {
    %c0_i32 = arith.constant 0 : i32
    %c0_i32_0 = arith.constant 0 : i32
    return %c0_i32, %arg1 : i32, i32
  }
  func.func @transform_1(%arg0: i32, %arg1: i32) -> (i32, i32) {
    %c0_i32 = arith.constant 0 : i32
    %c0_i32_0 = arith.constant 0 : i32
    %c0_i32_1 = arith.constant 0 : i32
    return %c0_i32, %c0_i32_0 : i32, i32
  }
  func.func @transform_2(%arg0: i32, %arg1: i32) -> (i32, i32) {
    %c0_i32 = arith.constant 0 : i32
    %c0_i32_0 = arith.constant 0 : i32
    %c0_i32_1 = arith.constant 0 : i32
    return %c0_i32, %c0_i32_0 : i32, i32
  }
  func.func @transform_3(%arg0: i32, %arg1: i32) -> (i32, i32) {
    %c0_i32 = arith.constant 0 : i32
    %c0_i32_0 = arith.constant 0 : i32
    %c0_i32_1 = arith.constant 0 : i32
    return %c0_i32, %c0_i32_0 : i32, i32
  }
  func.func @transform_4(%arg0: i32, %arg1: i32) -> (i32, i32) {
    %c0_i32 = arith.constant 0 : i32
    %c0_i32_0 = arith.constant 0 : i32
    return %c0_i32, %arg1 : i32, i32
  }
}

module attributes {stable_mosaic.version = 11 : i64} {
  func.func @_conv_bn_act_kernel(%arg0: i32, %arg1: i32, %arg2: memref<72x128xf32, #tpu.memory_space<vmem>>, %arg3: memref<16x72xf32, #tpu.memory_space<vmem>>, %arg4: memref<16x1xf32, #tpu.memory_space<vmem>>, %arg5: memref<16x1xf32, #tpu.memory_space<vmem>>, %arg6: memref<16x128xf32, #tpu.memory_space<vmem>>, %arg7: memref<16x1xf32, #tpu.memory_space<vmem>>, %arg8: memref<16x1xf32, #tpu.memory_space<vmem>>, %arg9: memref<16x1xf32, #tpu.memory_space<vmem>>, %arg10: memref<16x1xf32, #tpu.memory_space<vmem>>) attributes {dimension_semantics = [#tpu.dimension_semantics<arbitrary>, #tpu.dimension_semantics<arbitrary>], iteration_bounds = array<i64: 2, 1>, scalar_prefetch = 0 : i64, scratch_operands = 4 : i64, tpu.core_type = #tpu.core_type<tc>, window_params = [{transform_indices = @transform_0, window_bounds = array<i64: 72, 128>}, {pipeline_mode = #tpu.pipeline_mode<synchronous>, transform_indices = @transform_1, window_bounds = array<i64: 16, 72>}, {pipeline_mode = #tpu.pipeline_mode<synchronous>, transform_indices = @transform_2, window_bounds = array<i64: 16, 1>}, {pipeline_mode = #tpu.pipeline_mode<synchronous>, transform_indices = @transform_3, window_bounds = array<i64: 16, 1>}, {transform_indices = @transform_4, window_bounds = array<i64: 16, 128>}]} {
    %c0 = arith.constant 0 : index
    %c0_0 = arith.constant 0 : index
    %0 = vector.load %arg3[%c0, %c0_0] : memref<16x72xf32, #tpu.memory_space<vmem>>, vector<16x72xf32>
    %c0_1 = arith.constant 0 : index
    %c0_2 = arith.constant 0 : index
    %1 = vector.load %arg2[%c0_1, %c0_2] : memref<72x128xf32, #tpu.memory_space<vmem>>, vector<72x128xf32>
    %cst = arith.constant dense<0.000000e+00> : vector<16x128xf32>
    %2 = tpu.matmul %0, %1, %cst {dimension_numbers = #tpu.dot_dimension_numbers<[1], [0], [0], [1], [0, 0, 1, 1], [], []>} : vector<16x72xf32>, vector<72x128xf32>, vector<16x128xf32> -> vector<16x128xf32>
    %c0_i32 = arith.constant 0 : i32
    %3 = arith.cmpi eq, %arg0, %c0_i32 : i32
    %c0_i32_3 = arith.constant 0 : i32
    %4 = arith.cmpi eq, %arg1, %c0_i32_3 : i32
    %5 = arith.andi %3, %4 : i1
    %6 = arith.extui %5 : i1 to i32
    %c0_i32_4 = arith.constant 0 : i32
    %7 = arith.cmpi ne, %6, %c0_i32_4 : i32
    scf.if %7 {
      %cst_11 = arith.constant 0.000000e+00 : f32
      %19 = vector.broadcast %cst_11 : f32 to vector<16x1xf32>
      %c0_12 = arith.constant 0 : index
      %c0_13 = arith.constant 0 : index
      %20 = vector.load %arg7[%c0_12, %c0_13] : memref<16x1xf32, #tpu.memory_space<vmem>>, vector<16x1xf32>
      tpu.vector_store %arg7[%c0_12, %c0_13], %19 {strides = array<i32>} : memref<16x1xf32, #tpu.memory_space<vmem>>, vector<16x1xf32>,
      %cst_14 = arith.constant 0.000000e+00 : f32
      %21 = vector.broadcast %cst_14 : f32 to vector<16x1xf32>
      %c0_15 = arith.constant 0 : index
      %c0_16 = arith.constant 0 : index
      %22 = vector.load %arg8[%c0_15, %c0_16] : memref<16x1xf32, #tpu.memory_space<vmem>>, vector<16x1xf32>
      tpu.vector_store %arg8[%c0_15, %c0_16], %21 {strides = array<i32>} : memref<16x1xf32, #tpu.memory_space<vmem>>, vector<16x1xf32>,
    } else {
    }
    %c0_i32_5 = arith.constant 0 : i32
    %8 = arith.cmpi eq, %arg0, %c0_i32_5 : i32
    %9 = arith.extui %8 : i1 to i32
    %c0_i32_6 = arith.constant 0 : i32
    %10 = arith.cmpi ne, %9, %c0_i32_6 : i32
    scf.if %10 {
      %c0_11 = arith.constant 0 : index
      %c0_12 = arith.constant 0 : index
      %19 = vector.load %arg7[%c0_11, %c0_12] : memref<16x1xf32, #tpu.memory_space<vmem>>, vector<16x1xf32>
      %cst_13 = arith.constant dense<0.000000e+00> : vector<16xf32>
      %20 = vector.multi_reduction <add>, %2, %cst_13 [1] : vector<16x128xf32> to vector<16xf32>
      %21 = vector.shape_cast %20 : vector<16xf32> to vector<16x1xf32>
      %22 = arith.addf %19, %21 : vector<16x1xf32>
      %c0_14 = arith.constant 0 : index
      %c0_15 = arith.constant 0 : index
      %23 = vector.load %arg7[%c0_14, %c0_15] : memref<16x1xf32, #tpu.memory_space<vmem>>, vector<16x1xf32>
      tpu.vector_store %arg7[%c0_14, %c0_15], %22 {strides = array<i32>} : memref<16x1xf32, #tpu.memory_space<vmem>>, vector<16x1xf32>,
      %c0_16 = arith.constant 0 : index
      %c0_17 = arith.constant 0 : index
      %24 = vector.load %arg8[%c0_16, %c0_17] : memref<16x1xf32, #tpu.memory_space<vmem>>, vector<16x1xf32>
      %25 = arith.mulf %2, %2 : vector<16x128xf32>
      %cst_18 = arith.constant dense<0.000000e+00> : vector<16xf32>
      %26 = vector.multi_reduction <add>, %25, %cst_18 [1] : vector<16x128xf32> to vector<16xf32>
      %27 = vector.shape_cast %26 : vector<16xf32> to vector<16x1xf32>
      %28 = arith.addf %24, %27 : vector<16x1xf32>
      %c0_19 = arith.constant 0 : index
      %c0_20 = arith.constant 0 : index
      %29 = vector.load %arg8[%c0_19, %c0_20] : memref<16x1xf32, #tpu.memory_space<vmem>>, vector<16x1xf32>
      tpu.vector_store %arg8[%c0_19, %c0_20], %28 {strides = array<i32>} : memref<16x1xf32, #tpu.memory_space<vmem>>, vector<16x1xf32>,
    } else {
    }
    %c1_i32 = arith.constant 1 : i32
    %11 = arith.cmpi eq, %arg0, %c1_i32 : i32
    %c0_i32_7 = arith.constant 0 : i32
    %12 = arith.cmpi eq, %arg1, %c0_i32_7 : i32
    %13 = arith.andi %11, %12 : i1
    %14 = arith.extui %13 : i1 to i32
    %c0_i32_8 = arith.constant 0 : i32
    %15 = arith.cmpi ne, %14, %c0_i32_8 : i32
    scf.if %15 {
      %c0_11 = arith.constant 0 : index
      %c0_12 = arith.constant 0 : index
      %19 = vector.load %arg7[%c0_11, %c0_12] : memref<16x1xf32, #tpu.memory_space<vmem>>, vector<16x1xf32>
      %cst_13 = arith.constant 7.812500e-03 : f32
      %20 = vector.broadcast %cst_13 : f32 to vector<16x1xf32>
      %21 = arith.mulf %19, %20 : vector<16x1xf32>
      %c0_14 = arith.constant 0 : index
      %c0_15 = arith.constant 0 : index
      %22 = vector.load %arg8[%c0_14, %c0_15] : memref<16x1xf32, #tpu.memory_space<vmem>>, vector<16x1xf32>
      %cst_16 = arith.constant 7.812500e-03 : f32
      %23 = vector.broadcast %cst_16 : f32 to vector<16x1xf32>
      %24 = arith.mulf %22, %23 : vector<16x1xf32>
      %25 = arith.mulf %21, %21 : vector<16x1xf32>
      %26 = arith.subf %24, %25 : vector<16x1xf32>
      %cst_17 = arith.constant 0.000000e+00 : f32
      %27 = vector.broadcast %cst_17 : f32 to vector<16x1xf32>
      %28 = arith.maximumf %26, %27 : vector<16x1xf32>
      %cst_18 = arith.constant 9.99999974E-6 : f32
      %29 = vector.broadcast %cst_18 : f32 to vector<16x1xf32>
      %30 = arith.addf %28, %29 : vector<16x1xf32>
      %31 = math.rsqrt %30 : vector<16x1xf32>
      %c0_19 = arith.constant 0 : index
      %c0_20 = arith.constant 0 : index
      %32 = vector.load %arg4[%c0_19, %c0_20] : memref<16x1xf32, #tpu.memory_space<vmem>>, vector<16x1xf32>
      %33 = arith.mulf %32, %31 : vector<16x1xf32>
      %c0_21 = arith.constant 0 : index
      %c0_22 = arith.constant 0 : index
      %34 = vector.load %arg9[%c0_21, %c0_22] : memref<16x1xf32, #tpu.memory_space<vmem>>, vector<16x1xf32>
      tpu.vector_store %arg9[%c0_21, %c0_22], %33 {strides = array<i32>} : memref<16x1xf32, #tpu.memory_space<vmem>>, vector<16x1xf32>,
      %c0_23 = arith.constant 0 : index
      %c0_24 = arith.constant 0 : index
      %35 = vector.load %arg5[%c0_23, %c0_24] : memref<16x1xf32, #tpu.memory_space<vmem>>, vector<16x1xf32>
      %36 = arith.mulf %21, %33 : vector<16x1xf32>
      %37 = arith.subf %35, %36 : vector<16x1xf32>
      %c0_25 = arith.constant 0 : index
      %c0_26 = arith.constant 0 : index
      %38 = vector.load %arg10[%c0_25, %c0_26] : memref<16x1xf32, #tpu.memory_space<vmem>>, vector<16x1xf32>
      tpu.vector_store %arg10[%c0_25, %c0_26], %37 {strides = array<i32>} : memref<16x1xf32, #tpu.memory_space<vmem>>, vector<16x1xf32>,
    } else {
    }
    %c1_i32_9 = arith.constant 1 : i32
    %16 = arith.cmpi eq, %arg0, %c1_i32_9 : i32
    %17 = arith.extui %16 : i1 to i32
    %c0_i32_10 = arith.constant 0 : i32
    %18 = arith.cmpi ne, %17, %c0_i32_10 : i32
    scf.if %18 {
      %c0_11 = arith.constant 0 : index
      %c0_12 = arith.constant 0 : index
      %19 = vector.load %arg9[%c0_11, %c0_12] : memref<16x1xf32, #tpu.memory_space<vmem>>, vector<16x1xf32>
      %20 = vector.broadcast %19 : vector<16x1xf32> to vector<16x128xf32>
      %21 = arith.mulf %2, %20 : vector<16x128xf32>
      %c0_13 = arith.constant 0 : index
      %c0_14 = arith.constant 0 : index
      %22 = vector.load %arg10[%c0_13, %c0_14] : memref<16x1xf32, #tpu.memory_space<vmem>>, vector<16x1xf32>
      %23 = vector.broadcast %22 : vector<16x1xf32> to vector<16x128xf32>
      %24 = arith.addf %21, %23 : vector<16x128xf32>
      %cst_15 = arith.constant 0.000000e+00 : f32
      %25 = vector.broadcast %cst_15 : f32 to vector<16x128xf32>
      %26 = arith.maximumf %24, %25 : vector<16x128xf32>
      %c0_16 = arith.constant 0 : index
      %c0_17 = arith.constant 0 : index
      %27 = vector.load %arg6[%c0_16, %c0_17] : memref<16x128xf32, #tpu.memory_space<vmem>>, vector<16x128xf32>
      tpu.vector_store %arg6[%c0_16, %c0_17], %26 {strides = array<i32>} : memref<16x128xf32, #tpu.memory_space<vmem>>, vector<16x128xf32>,
    } else {
    }
    return
  }
  func.func @transform_0(%arg0: i32, %arg1: i32) -> (i32, i32) {
    %c0_i32 = arith.constant 0 : i32
    %c0_i32_0 = arith.constant 0 : i32
    return %c0_i32, %arg1 : i32, i32
  }
  func.func @transform_1(%arg0: i32, %arg1: i32) -> (i32, i32) {
    %c0_i32 = arith.constant 0 : i32
    %c0_i32_0 = arith.constant 0 : i32
    %c0_i32_1 = arith.constant 0 : i32
    return %c0_i32, %c0_i32_0 : i32, i32
  }
  func.func @transform_2(%arg0: i32, %arg1: i32) -> (i32, i32) {
    %c0_i32 = arith.constant 0 : i32
    %c0_i32_0 = arith.constant 0 : i32
    %c0_i32_1 = arith.constant 0 : i32
    return %c0_i32, %c0_i32_0 : i32, i32
  }
  func.func @transform_3(%arg0: i32, %arg1: i32) -> (i32, i32) {
    %c0_i32 = arith.constant 0 : i32
    %c0_i32_0 = arith.constant 0 : i32
    %c0_i32_1 = arith.constant 0 : i32
    return %c0_i32, %c0_i32_0 : i32, i32
  }
  func.func @transform_4(%arg0: i32, %arg1: i32) -> (i32, i32) {
    %c0_i32 = arith.constant 0 : i32
    %c0_i32_0 = arith.constant 0 : i32
    return %c0_i32, %arg1 : i32, i32
  }
}

</mosaic_0001>

<llo_original>
// kernel: _lambda_.2
$region0: #{_lambda_.2}
  #allocation0 [shape = 'u32[]', space=smem, size = 0x4, offset = 0x4, fixed_abs, tag = 'smem constant byte address 0x4 - core index']
  #allocation1 [shape = 'u32[144,128]{1,0:T(1,128)}', space=vmem, size = 0x12000, scoped, tag = 'internal scratch']
  #allocation2 [shape = 'f32[8,1]{1,0:T(8,128)}', space=vmem, size = 0x1000, scoped, tag = 'scratch operand']
  #allocation3 [shape = 'f32[8,1]{1,0:T(8,128)}', space=vmem, size = 0x1000, scoped, tag = 'scratch operand']
  #allocation4 [shape = 'f32[8,1]{1,0:T(8,128)}', space=vmem, size = 0x1000, scoped, tag = 'scratch operand']
  #allocation5 [shape = 'f32[8,1]{1,0:T(8,128)}', space=vmem, size = 0x1000, scoped, tag = 'scratch operand']
  %s0 = inlined_call_operand.vmem [shape: f32[40,128], index: 0, kind: input, shape index: {}]
  %s1 = inlined_call_operand.vmem [shape: f32[8,40], index: 1, kind: input, shape index: {}]
  %s2 = inlined_call_operand.vmem [shape: f32[8,1], index: 2, kind: input, shape index: {}]
  %s3 = inlined_call_operand.vmem [shape: f32[8,1], index: 3, kind: input, shape index: {}]
  %s4 = inlined_call_operand.vmem [shape: f32[8,128], index: 4, kind: output, shape index: {}]
  %s5 = sld [smem:[#allocation0]]
  $region65: #{_lambda_.2} parent=0
    _
  %s7 = ssub.s32 1, %s5
  %s8 = scalar_select 0, %s7, %s5
  loop: start=0, step=1, limit=4
  $region2: #{_lambda_.2} parent=0 // loop_pre_header
    _
  $region3: #{_lambda_.2} parent=0 // loop_header
    %s10 = sphi 0, %s14
    %p11 = scmp.ge.s32.totalorder %s10, 4
    %s17 = sphi 0, %s29
    %s18 = sphi 0, %s25
    %s19 = sphi 0, %s17
    %s20 = sphi 0, %s18
    %s21 = sphi 0, %s19
    %s22 = sphi 0, %s20
    %s32 = sphi 0, %s34
    %s35 = sphi 0, %s32
    %s36 = sphi 0, %s35
    %s52 = sphi 0, %s36
    %s56 = sphi 0, %s56
    %s58 = sphi 0, %s56
    %s59 = sphi 0, %s58
    %s73 = sphi 0, %s59
    %s77 = sphi 0, %s77
    %s79 = sphi 0, %s77
    %s80 = sphi 0, %s79
    %s94 = sphi 0, %s80
    %s98 = sphi 0, %s98
    %s100 = sphi 0, %s98
    %s101 = sphi 0, %s100
    %s115 = sphi 0, %s101
    %s121 = sphi 0, %s123
    %s124 = sphi 0, %s121
    %s125 = sphi 0, %s124
    %s141 = sphi 0, %s125
  $region4: #{_lambda_.2} parent=0 // loop_header_branch
    %13 = sbr.rel (%p11) target = $region8
  $region5: #{_lambda_.2} parent=0 // loop_body
    %s15 = ssub.s32 %s10, 1
    %s16 = ssub.s32 %s10, 2
    %s23 = sadd.s32 1, %s18
    %p24 = scmp.ge.s32.totalorder %s23, 1
    %s25 = scalar_select %p24, 0, %s23
    %s26 = sadd.s32 1, %s17
    %s27 = scalar_select %p24, %s26, %s17
    %p28 = scmp.ge.s32.totalorder %s27, 2
    %s29 = scalar_select %p28, 0, %s27
    %s30 = ssub.s32 %s18, %s25
    %p31 = scmp.eq.s32.totalorder %s30, 0
    %s33 = sadd.s32 %s32, 1
    %s34 = scalar_select %p31, %s32, %s33
    %p37 = pneg %p31
    %p38 = scmp.eq.s32.totalorder %s10, 1
    %p39 = por %p37, %p38
    %p40 = scmp.ne.s32.totalorder %s32, %s35
    %p41 = scmp.eq.s32.totalorder %s10, 0
    %p42 = por %p40, %p41
    %p43 = scmp.ne.s32.totalorder %s32, %s35
    %p44 = scmp.eq.s32.totalorder %s15, 1
    %p45 = por %p43, %p44
    %p46 = scmp.ne.s32.totalorder %s35, %s36
    %p47 = scmp.eq.s32.totalorder %s15, 0
    %p48 = por %p46, %p47
    %p49 = scmp.ne.s32.totalorder %s35, %s36
    %p50 = scmp.eq.s32.totalorder %s16, 1
    %p51 = por %p49, %p50
    %p53 = scmp.ne.s32.totalorder %s36, %s52
    %p54 = scmp.eq.s32.totalorder %s16, 0
    %p55 = por %p53, %p54
    %s57 = sadd.s32 %s56, 1
    %p60 = scmp.eq.s32.totalorder %s10, 1
    %p61 = scmp.ne.s32.totalorder %s56, %s58
    %p62 = scmp.eq.s32.totalorder %s10, 0
    %p63 = por %p61, %p62
    %p64 = scmp.ne.s32.totalorder %s56, %s58
    %p65 = scmp.eq.s32.totalorder %s15, 1
    %p66 = por %p64, %p65
    %p67 = scmp.ne.s32.totalorder %s58, %s59
    %p68 = scmp.eq.s32.totalorder %s15, 0
    %p69 = por %p67, %p68
    %p70 = scmp.ne.s32.totalorder %s58, %s59
    %p71 = scmp.eq.s32.totalorder %s16, 1
    %p72 = por %p70, %p71
    %p74 = scmp.ne.s32.totalorder %s59, %s73
    %p75 = scmp.eq.s32.totalorder %s16, 0
    %p76 = por %p74, %p75
    %s78 = sadd.s32 %s77, 1
    %p81 = scmp.eq.s32.totalorder %s10, 1
    %p82 = scmp.ne.s32.totalorder %s77, %s79
    %p83 = scmp.eq.s32.totalorder %s10, 0
    %p84 = por %p82, %p83
    %p85 = scmp.ne.s32.totalorder %s77, %s79
    %p86 = scmp.eq.s32.totalorder %s15, 1
    %p87 = por %p85, %p86
    %p88 = scmp.ne.s32.totalorder %s79, %s80
    %p89 = scmp.eq.s32.totalorder %s15, 0
    %p90 = por %p88, %p89
    %p91 = scmp.ne.s32.totalorder %s79, %s80
    %p92 = scmp.eq.s32.totalorder %s16, 1
    %p93 = por %p91, %p92
    %p95 = scmp.ne.s32.totalorder %s80, %s94
    %p96 = scmp.eq.s32.totalorder %s16, 0
    %p97 = por %p95, %p96
    %s99 = sadd.s32 %s98, 1
    %p102 = scmp.eq.s32.totalorder %s10, 1
    %p103 = scmp.ne.s32.totalorder %s98, %s100
    %p104 = scmp.eq.s32.totalorder %s10, 0
    %p105 = por %p103, %p104
    %p106 = scmp.ne.s32.totalorder %s98, %s100
    %p107 = scmp.eq.s32.totalorder %s15, 1
    %p108 = por %p106, %p107
    %p109 = scmp.ne.s32.totalorder %s100, %s101
    %p110 = scmp.eq.s32.totalorder %s15, 0
    %p111 = por %p109, %p110
    %p112 = scmp.ne.s32.totalorder %s100, %s101
    %p113 = scmp.eq.s32.totalorder %s16, 1
    %p114 = por %p112, %p113
    %p116 = scmp.ne.s32.totalorder %s101, %s115
    %p117 = scmp.eq.s32.totalorder %s16, 0
    %p118 = por %p116, %p117
    %s119 = ssub.s32 %s18, %s25
    %p120 = scmp.eq.s32.totalorder %s119, 0
    %s122 = sadd.s32 %s121, 1
    %s123 = scalar_select %p120, %s121, %s122
    %p126 = pneg %p120
    %p127 = scmp.eq.s32.totalorder %s10, 1
    %p128 = por %p126, %p127
    %p129 = scmp.ne.s32.totalorder %s121, %s124
    %p130 = scmp.eq.s32.totalorder %s10, 0
    %p131 = por %p129, %p130
    %p132 = scmp.ne.s32.totalorder %s121, %s124
    %p133 = scmp.eq.s32.totalorder %s15, 1
    %p134 = por %p132, %p133
    %p135 = scmp.ne.s32.totalorder %s124, %s125
    %p136 = scmp.eq.s32.totalorder %s15, 0
    %p137 = por %p135, %p136
    %p138 = scmp.ne.s32.totalorder %s124, %s125
    %p139 = scmp.eq.s32.totalorder %s16, 1
    %p140 = por %p138, %p139
    %p142 = scmp.ne.s32.totalorder %s125, %s141
    %p143 = scmp.eq.s32.totalorder %s16, 0
    %p144 = por %p142, %p143
    %p145 = scmp.le.s32.totalorder 1, %s10
    %p146 = scmp.lt.s32.totalorder %s10, 3
    %p147 = pnand %p145, %p146
    %p148 = pneg %p147
    // Predicated region
    $region9: #{_lambda_.2} parent=5 // pred_check
      _
    $region10: #{_lambda_.2} parent=5 // pred_check_branch
      %150 = sbr.rel (%p147) target = $region12
    $region11: #{_lambda_.2} parent=5 // pred_region
      %s151 = ssub.s32 %s10, 1
      // Predicated region
      $region13: #{_lambda_.2} parent=11 // pred_check
        %p152 = pneg %p48
      $region14: #{_lambda_.2} parent=11 // pred_check_branch
        %154 = sbr.rel (%p152) target = $region16
      $region15: #{_lambda_.2} parent=11 // pred_region
        %p155 = scmp.lt.s32.totalorder %s20, 0
        %s156 = scalar_select %p155, %s20, 0
        %s157 = smul.addr %s156, 8
        %s158 = scalar_lea.vmem %s0, %s157
      $region16: #{_lambda_.2} parent=11 // pred_fallthru
        _
      // Predicated region
      $region17: #{_lambda_.2} parent=11 // pred_check
        %p159 = pneg %p69
      $region18: #{_lambda_.2} parent=11 // pred_check_branch
        %161 = sbr.rel (%p159) target = $region20
      $region19: #{_lambda_.2} parent=11 // pred_region
        _
      $region20: #{_lambda_.2} parent=11 // pred_fallthru
        _
      // Predicated region
      $region21: #{_lambda_.2} parent=11 // pred_check
        %p162 = pneg %p90
      $region22: #{_lambda_.2} parent=11 // pred_check_branch
        %164 = sbr.rel (%p162) target = $region24
      $region23: #{_lambda_.2} parent=11 // pred_region
        _
      $region24: #{_lambda_.2} parent=11 // pred_fallthru
        _
      // Predicated region
      $region25: #{_lambda_.2} parent=11 // pred_check
        %p165 = pneg %p111
      $region26: #{_lambda_.2} parent=11 // pred_check_branch
        %167 = sbr.rel (%p165) target = $region28
      $region27: #{_lambda_.2} parent=11 // pred_region
        _
      $region28: #{_lambda_.2} parent=11 // pred_fallthru
        _
    $region12: #{_lambda_.2} parent=5 // pred_fallthru
      _
    %p168 = scmp.lt.s32.totalorder %s10, 2
    // Predicated region
    $region29: #{_lambda_.2} parent=5 // pred_check
      %p169 = pneg %p168
    $region30: #{_lambda_.2} parent=5 // pred_check_branch
      %171 = sbr.rel (%p169) target = $region32
    $region31: #{_lambda_.2} parent=5 // pred_region
      _
    $region32: #{_lambda_.2} parent=5 // pred_fallthru
      _
    %p172 = scmp.le.s32.totalorder 1, %s10
    %p173 = scmp.lt.s32.totalorder %s10, 3
    %p174 = pnand %p172, %p173
    %p175 = pneg %p174
    // Predicated region
    $region33: #{_lambda_.2} parent=5 // pred_check
      _
    $region34: #{_lambda_.2} parent=5 // pred_check_branch
      %177 = sbr.rel (%p174) target = $region36
    $region35: #{_lambda_.2} parent=5 // pred_region
      %s178 = ssub.s32 %s10, 1
      %p179 = scmp.lt.s32.totalorder %s20, 0
      %s180 = scalar_select %p179, %s20, 0
      %s181 = smul.addr %s180, 8
      %s182 = scalar_lea.vmem %s0, %s181
      %p183 = pneg %p48
      %p184 = pneg %p45
      %p185 = pneg %p69
      %p186 = pneg %p66
      %p187 = pneg %p90
      %p188 = pneg %p87
      %p189 = pneg %p111
      %p190 = pneg %p108
      %p191 = pneg %p137
      %p192 = pneg %p134
      %p193 = scmp.lt.s32.totalorder %s20, 0
      %s194 = scalar_select %p193, %s20, 0
      %s195 = smul.addr %s194, 8
      %s196 = scalar_lea.vmem %s4, %s195
      %p197 = scmp.lt.s32.totalorder %s20, 0
      %s198 = scalar_select %p197, %s20, 0
      %s199 = smul.addr %s198, 8
      %s200 = scalar_lea.vmem %s0, %s199
      %p201 = scmp.lt.s32.totalorder %s20, 0
      %s202 = scalar_select %p201, %s20, 0
      %s203 = smul.addr %s202, 8
      %s204 = scalar_lea.vmem %s4, %s203
      %v205 = vld [vmem:[%s1] sm:$0xff]
      %v206 = vld [vmem:[%s200] sm:$0xff]
      %v207 = vld [vmem:[%s200 + $0x8] sm:$0xff]
      %v208 = vld [vmem:[%s200 + $0x10] sm:$0xff]
      %v209 = vld [vmem:[%s200 + $0x18] sm:$0xff]
      %v210 = vld [vmem:[%s200 + $0x20] sm:$0xff]
      %vm211 = vcmask 326656
      %v213 = vsel %vm211, %v205, 0
      %215 = vmatprep.subr.mxu0 0.0
      %216 = vmatpush1.msra.mxu0 0.0
      %217 = vmatprep.subr.mxu0 0.0
      %218 = vmatpush1.msra.mxu0 0.0
      %219 = vmatprep.subr.mxu0 0.0
      %220 = vmatpush1.msra.mxu0 0.0
      %221 = vmatprep.subr.mxu0 0.0
      %222 = vmatpush1.msra.mxu0 0.0
      %223 = vmatprep.subr.mxu0 0.0
      %224 = vmatpush1.msra.mxu0 0.0
      %225 = vmatprep.subr.mxu0 0.0
      %226 = vmatpush1.msra.mxu0 0.0
      %227 = vmatprep.subr.mxu0 0.0
      %228 = vmatpush1.msra.mxu0 0.0
      %229 = vmatprep.subr.mxu0 0.0
      %230 = vmatpush1.msra.mxu0 0.0
      %231 = vmatprep.subr.mxu0 0.0
      %232 = vmatpush1.msra.mxu0 0.0
      %233 = vmatprep.subr.mxu0 0.0
      %234 = vmatpush1.msra.mxu0 0.0
      %235 = vmatprep.subr.mxu0 0.0
      %236 = vmatpush1.msra.mxu0 0.0
      %237 = vmatprep.subr.mxu0 0.0
      %238 = vmatpush1.msra.mxu0 %v210
      %239 = vmatprep.subr.mxu0 0.0
      %240 = vmatpush1.msra.mxu0 %v209
      %241 = vmatprep.subr.mxu0 0.0
      %242 = vmatpush1.msra.mxu0 %v208
      %243 = vmatprep.subr.mxu0 0.0
      %244 = vmatpush1.msra.mxu0 %v207
      %245 = vmatprep.subr.mxu0 0.0
      %246 = vmatpush1.msra.mxu0 %v206
      %247 = vmatprep.subr.mxu0 0.0
      %248 = vmatpush2.msra.mxu0 0.0
      %249 = vmatprep.subr.mxu0 0.0
      %250 = vmatpush2.msra.mxu0 0.0
      %251 = vmatprep.subr.mxu0 0.0
      %252 = vmatpush2.msra.mxu0 0.0
      %253 = vmatprep.subr.mxu0 0.0
      %254 = vmatpush2.msra.mxu0 0.0
      %255 = vmatprep.subr.mxu0 0.0
      %256 = vmatpush2.msra.mxu0 0.0
      %257 = vmatprep.subr.mxu0 0.0
      %258 = vmatpush2.msra.mxu0 0.0
      %259 = vmatprep.subr.mxu0 0.0
      %260 = vmatpush2.msra.mxu0 0.0
      %261 = vmatprep.subr.mxu0 0.0
      %262 = vmatpush2.msra.mxu0 0.0
      %263 = vmatprep.subr.mxu0 0.0
      %264 = vmatpush2.msra.mxu0 0.0
      %265 = vmatprep.subr.mxu0 0.0
      %266 = vmatpush2.msra.mxu0 0.0
      %267 = vmatprep.subr.mxu0 0.0
      %268 = vmatpush2.msra.mxu0 0.0
      %269 = vmatprep.subr.mxu0 0.0
      %270 = vmatpush2.msra.mxu0 0.0
      %271 = vmatprep.subr.mxu0 0.0
      %272 = vmatpush2.msra.mxu0 0.0
      %273 = vmatprep.subr.mxu0 0.0
      %274 = vmatpush2.msra.mxu0 0.0
      %275 = vmatprep.subr.mxu0 0.0
      %276 = vmatpush2.msra.mxu0 0.0
      %277 = vmatprep.subr.mxu0 0.0
      %278 = vmatpush2.msra.mxu0 0.0
      %279 = vmatprep.mubr.f32.mxu0 0.0
      %280 = vmatmul.mubr.f32.gmra.mxu0 %v213
      %v281 = vpop.f32.mrf.mxu0
      %v282 = vadd.f32 0.0, %v281
      %v283 = vpop.f32.mrf.mxu0
      %284 = vdwg.mxu0
      %p285 = scmp.eq.s32.totalorder %s19, 0
      %p286 = scmp.eq.s32.totalorder %s20, 0
      %p287 = pnand %p285, %p286
      %p288 = pneg %p287
      // Predicated region
      $region37: #{_lambda_.2} parent=35 // pred_check
        _
      $region38: #{_lambda_.2} parent=35 // pred_check_branch
        %290 = sbr.rel (%p287) target = $region40
      $region39: #{_lambda_.2} parent=35 // pred_region
        %vm291 = vcmask 7168
        %292 = vst.msk [vmem:[#allocation2] sm:$0xff] %vm291, 0.0
        %293 = vst.msk [vmem:[#allocation3] sm:$0xff] %vm291, 0.0
      $region40: #{_lambda_.2} parent=35 // pred_fallthru
        _
      // Predicated region
      $region41: #{_lambda_.2} parent=35 // pred_check
        %p294 = pneg %p285
      $region42: #{_lambda_.2} parent=35 // pred_check_branch
        %296 = sbr.rel (%p294) target = $region44
      $region43: #{_lambda_.2} parent=35 // pred_region
        %v297 = vld [vmem:[#allocation2] sm:$0xff]
        %298 = vadd.xlane.f32.xlu0 %v282
        %v299 = vpop.xlane.xlu0 %298
        %v300 = vadd.f32 %v297, %v299
        %vm301 = vcmask 7168
        %302 = vst.msk [vmem:[#allocation2] sm:$0xff] %vm301, %v300
        %v303 = vld [vmem:[#allocation3] sm:$0xff]
        %v304 = vmul.f32 %v282, %v282
        %305 = vadd.xlane.f32.xlu0 %v304
        %v306 = vpop.xlane.xlu0 %305
        %v307 = vadd.f32 %v303, %v306
        %308 = vst.msk [vmem:[#allocation3] sm:$0xff] %vm301, %v307
      $region44: #{_lambda_.2} parent=35 // pred_fallthru
        _
      %p309 = scmp.eq.s32.totalorder %s19, 1
      %p310 = pnand %p309, %p286
      %p311 = pneg %p310
      // Predicated region
      $region45: #{_lambda_.2} parent=35 // pred_check
        _
      $region46: #{_lambda_.2} parent=35 // pred_check_branch
        %313 = sbr.rel (%p310) target = $region48
      $region47: #{_lambda_.2} parent=35 // pred_region
        %v314 = vld [vmem:[#allocation2] sm:$0xff]
        %v315 = vmul.f32 %v314, 0.0078125
        %v316 = vld [vmem:[#allocation3] sm:$0xff]
        %v317 = vmul.f32 %v316, 0.0078125
        %v318 = vmul.f32 %v315, %v315
        %v319 = vsub.f32 %v317, %v318
        %v320 = vmax.f32 %v319, 0.0
        %v321 = vadd.f32 %v320, 1e-05
        %v322 = vrsqrt.pop %v321
        %v323 = vld [vmem:[%s2] sm:$0xff]
        %v324 = vmul.f32 %v323, %v322
        %vm325 = vcmask 7168
        %326 = vst.msk [vmem:[#allocation4] sm:$0xff] %vm325, %v324
        %v327 = vld [vmem:[%s3] sm:$0xff]
        %v328 = vmul.f32 %v315, %v324
        %v329 = vsub.f32 %v327, %v328
        %330 = vst.msk [vmem:[#allocation5] sm:$0xff] %vm325, %v329
      $region48: #{_lambda_.2} parent=35 // pred_fallthru
        _
      // Predicated region
      $region49: #{_lambda_.2} parent=35 // pred_check
        %p331 = pneg %p309
      $region50: #{_lambda_.2} parent=35 // pred_check_branch
        %333 = sbr.rel (%p331) target = $region52
      $region51: #{_lambda_.2} parent=35 // pred_region
        %v334 = vld [vmem:[#allocation4] sm:$0xff]
        %336 = vset.pattern.permute.xlu0 0
        %337 = vperm.xlu0 %336, %v334
        %v338 = vpop.permute.xlu0 %337
        %v340 = vmul.f32 %v282, %v338
        %v341 = vld [vmem:[#allocation5] sm:$0xff]
        %343 = vset.pattern.permute.xlu0 0
        %344 = vperm.xlu0 %343, %v341
        %v345 = vpop.permute.xlu0 %344
        %v347 = vadd.f32 %v340, %v345
        %v348 = vmax.f32 %v347, 0.0
        %349 = vst [vmem:[%s204] sm:$0xff] %v348
      $region52: #{_lambda_.2} parent=35 // pred_fallthru
        _
      %p350 = scmp.lt.s32.totalorder %s20, 0
      %s351 = scalar_select %p350, %s20, 0
      %s352 = smul.addr %s351, 8
      %s353 = scalar_lea.vmem %s4, %s352
      // Predicated region
      $region53: #{_lambda_.2} parent=35 // pred_check
        %p354 = pneg %p134
      $region54: #{_lambda_.2} parent=35 // pred_check_branch
        %356 = sbr.rel (%p354) target = $region56
      $region55: #{_lambda_.2} parent=35 // pred_region
        _
      $region56: #{_lambda_.2} parent=35 // pred_fallthru
        _
      // Predicated region
      $region57: #{_lambda_.2} parent=35 // pred_check
        %p357 = pneg %p134
      $region58: #{_lambda_.2} parent=35 // pred_check_branch
        %359 = sbr.rel (%p357) target = $region60
      $region59: #{_lambda_.2} parent=35 // pred_region
        %p360 = scmp.lt.s32.totalorder %s20, 0
        %s361 = scalar_select %p360, %s20, 0
        %s362 = smul.addr %s361, 8
        %s363 = scalar_lea.vmem %s4, %s362
      $region60: #{_lambda_.2} parent=35 // pred_fallthru
        _
    $region36: #{_lambda_.2} parent=5 // pred_fallthru
      _
    %p364 = scmp.le.s32.totalorder 2, %s10
    // Predicated region
    $region61: #{_lambda_.2} parent=5 // pred_check
      %p365 = pneg %p364
    $region62: #{_lambda_.2} parent=5 // pred_check_branch
      %367 = sbr.rel (%p365) target = $region64
    $region63: #{_lambda_.2} parent=5 // pred_region
      %s368 = ssub.s32 %s10, 2
    $region64: #{_lambda_.2} parent=5 // pred_fallthru
      _
  $region6: #{_lambda_.2} parent=0 // loop_footer
    %s14 = sadd.s32 1, %s10
  $region7: #{_lambda_.2} parent=0 // loop_footer_branch
    %9 = sbr.rel target = $region3
  $region8: #{_lambda_.2} parent=0 // loop_exit
    _

// kernel: _lambda_.3
$region0: #{_lambda_.3}
  #allocation0 [shape = 'u32[]', space=smem, size = 0x4, offset = 0x4, fixed_abs, tag = 'smem constant byte address 0x4 - core index']
  #allocation1 [shape = 'u32[144,128]{1,0:T(1,128)}', space=vmem, size = 0x12000, scoped, tag = 'internal scratch']
  #allocation2 [shape = 'f32[16,1]{1,0:T(8,128)}', space=vmem, size = 0x2000, scoped, tag = 'scratch operand']
  #allocation3 [shape = 'f32[16,1]{1,0:T(8,128)}', space=vmem, size = 0x2000, scoped, tag = 'scratch operand']
  #allocation4 [shape = 'f32[16,1]{1,0:T(8,128)}', space=vmem, size = 0x2000, scoped, tag = 'scratch operand']
  #allocation5 [shape = 'f32[16,1]{1,0:T(8,128)}', space=vmem, size = 0x2000, scoped, tag = 'scratch operand']
  %s0 = inlined_call_operand.vmem [shape: f32[72,128], index: 0, kind: input, shape index: {}]
  %s1 = inlined_call_operand.vmem [shape: f32[16,72], index: 1, kind: input, shape index: {}]
  %s2 = inlined_call_operand.vmem [shape: f32[16,1], index: 2, kind: input, shape index: {}]
  %s3 = inlined_call_operand.vmem [shape: f32[16,1], index: 3, kind: input, shape index: {}]
  %s4 = inlined_call_operand.vmem [shape: f32[16,128], index: 4, kind: output, shape index: {}]
  %s5 = sld [smem:[#allocation0]]
  $region65: #{_lambda_.3} parent=0
    _
  %s7 = ssub.s32 1, %s5
  %s8 = scalar_select 0, %s7, %s5
  loop: start=0, step=1, limit=4
  $region2: #{_lambda_.3} parent=0 // loop_pre_header
    _
  $region3: #{_lambda_.3} parent=0 // loop_header
    %s10 = sphi 0, %s14
    %p11 = scmp.ge.s32.totalorder %s10, 4
    %s17 = sphi 0, %s29
    %s18 = sphi 0, %s25
    %s19 = sphi 0, %s17
    %s20 = sphi 0, %s18
    %s21 = sphi 0, %s19
    %s22 = sphi 0, %s20
    %s32 = sphi 0, %s34
    %s35 = sphi 0, %s32
    %s36 = sphi 0, %s35
    %s52 = sphi 0, %s36
    %s56 = sphi 0, %s56
    %s58 = sphi 0, %s56
    %s59 = sphi 0, %s58
    %s73 = sphi 0, %s59
    %s77 = sphi 0, %s77
    %s79 = sphi 0, %s77
    %s80 = sphi 0, %s79
    %s94 = sphi 0, %s80
    %s98 = sphi 0, %s98
    %s100 = sphi 0, %s98
    %s101 = sphi 0, %s100
    %s115 = sphi 0, %s101
    %s121 = sphi 0, %s123
    %s124 = sphi 0, %s121
    %s125 = sphi 0, %s124
    %s141 = sphi 0, %s125
  $region4: #{_lambda_.3} parent=0 // loop_header_branch
    %13 = sbr.rel (%p11) target = $region8
  $region5: #{_lambda_.3} parent=0 // loop_body
    %s15 = ssub.s32 %s10, 1
    %s16 = ssub.s32 %s10, 2
    %s23 = sadd.s32 1, %s18
    %p24 = scmp.ge.s32.totalorder %s23, 1
    %s25 = scalar_select %p24, 0, %s23
    %s26 = sadd.s32 1, %s17
    %s27 = scalar_select %p24, %s26, %s17
    %p28 = scmp.ge.s32.totalorder %s27, 2
    %s29 = scalar_select %p28, 0, %s27
    %s30 = ssub.s32 %s18, %s25
    %p31 = scmp.eq.s32.totalorder %s30, 0
    %s33 = sadd.s32 %s32, 1
    %s34 = scalar_select %p31, %s32, %s33
    %p37 = pneg %p31
    %p38 = scmp.eq.s32.totalorder %s10, 1
    %p39 = por %p37, %p38
    %p40 = scmp.ne.s32.totalorder %s32, %s35
    %p41 = scmp.eq.s32.totalorder %s10, 0
    %p42 = por %p40, %p41
    %p43 = scmp.ne.s32.totalorder %s32, %s35
    %p44 = scmp.eq.s32.totalorder %s15, 1
    %p45 = por %p43, %p44
    %p46 = scmp.ne.s32.totalorder %s35, %s36
    %p47 = scmp.eq.s32.totalorder %s15, 0
    %p48 = por %p46, %p47
    %p49 = scmp.ne.s32.totalorder %s35, %s36
    %p50 = scmp.eq.s32.totalorder %s16, 1
    %p51 = por %p49, %p50
    %p53 = scmp.ne.s32.totalorder %s36, %s52
    %p54 = scmp.eq.s32.totalorder %s16, 0
    %p55 = por %p53, %p54
    %s57 = sadd.s32 %s56, 1
    %p60 = scmp.eq.s32.totalorder %s10, 1
    %p61 = scmp.ne.s32.totalorder %s56, %s58
    %p62 = scmp.eq.s32.totalorder %s10, 0
    %p63 = por %p61, %p62
    %p64 = scmp.ne.s32.totalorder %s56, %s58
    %p65 = scmp.eq.s32.totalorder %s15, 1
    %p66 = por %p64, %p65
    %p67 = scmp.ne.s32.totalorder %s58, %s59
    %p68 = scmp.eq.s32.totalorder %s15, 0
    %p69 = por %p67, %p68
    %p70 = scmp.ne.s32.totalorder %s58, %s59
    %p71 = scmp.eq.s32.totalorder %s16, 1
    %p72 = por %p70, %p71
    %p74 = scmp.ne.s32.totalorder %s59, %s73
    %p75 = scmp.eq.s32.totalorder %s16, 0
    %p76 = por %p74, %p75
    %s78 = sadd.s32 %s77, 1
    %p81 = scmp.eq.s32.totalorder %s10, 1
    %p82 = scmp.ne.s32.totalorder %s77, %s79
    %p83 = scmp.eq.s32.totalorder %s10, 0
    %p84 = por %p82, %p83
    %p85 = scmp.ne.s32.totalorder %s77, %s79
    %p86 = scmp.eq.s32.totalorder %s15, 1
    %p87 = por %p85, %p86
    %p88 = scmp.ne.s32.totalorder %s79, %s80
    %p89 = scmp.eq.s32.totalorder %s15, 0
    %p90 = por %p88, %p89
    %p91 = scmp.ne.s32.totalorder %s79, %s80
    %p92 = scmp.eq.s32.totalorder %s16, 1
    %p93 = por %p91, %p92
    %p95 = scmp.ne.s32.totalorder %s80, %s94
    %p96 = scmp.eq.s32.totalorder %s16, 0
    %p97 = por %p95, %p96
    %s99 = sadd.s32 %s98, 1
    %p102 = scmp.eq.s32.totalorder %s10, 1
    %p103 = scmp.ne.s32.totalorder %s98, %s100
    %p104 = scmp.eq.s32.totalorder %s10, 0
    %p105 = por %p103, %p104
    %p106 = scmp.ne.s32.totalorder %s98, %s100
    %p107 = scmp.eq.s32.totalorder %s15, 1
    %p108 = por %p106, %p107
    %p109 = scmp.ne.s32.totalorder %s100, %s101
    %p110 = scmp.eq.s32.totalorder %s15, 0
    %p111 = por %p109, %p110
    %p112 = scmp.ne.s32.totalorder %s100, %s101
    %p113 = scmp.eq.s32.totalorder %s16, 1
    %p114 = por %p112, %p113
    %p116 = scmp.ne.s32.totalorder %s101, %s115
    %p117 = scmp.eq.s32.totalorder %s16, 0
    %p118 = por %p116, %p117
    %s119 = ssub.s32 %s18, %s25
    %p120 = scmp.eq.s32.totalorder %s119, 0
    %s122 = sadd.s32 %s121, 1
    %s123 = scalar_select %p120, %s121, %s122
    %p126 = pneg %p120
    %p127 = scmp.eq.s32.totalorder %s10, 1
    %p128 = por %p126, %p127
    %p129 = scmp.ne.s32.totalorder %s121, %s124
    %p130 = scmp.eq.s32.totalorder %s10, 0
    %p131 = por %p129, %p130
    %p132 = scmp.ne.s32.totalorder %s121, %s124
    %p133 = scmp.eq.s32.totalorder %s15, 1
    %p134 = por %p132, %p133
    %p135 = scmp.ne.s32.totalorder %s124, %s125
    %p136 = scmp.eq.s32.totalorder %s15, 0
    %p137 = por %p135, %p136
    %p138 = scmp.ne.s32.totalorder %s124, %s125
    %p139 = scmp.eq.s32.totalorder %s16, 1
    %p140 = por %p138, %p139
    %p142 = scmp.ne.s32.totalorder %s125, %s141
    %p143 = scmp.eq.s32.totalorder %s16, 0
    %p144 = por %p142, %p143
    %p145 = scmp.le.s32.totalorder 1, %s10
    %p146 = scmp.lt.s32.totalorder %s10, 3
    %p147 = pnand %p145, %p146
    %p148 = pneg %p147
    // Predicated region
    $region9: #{_lambda_.3} parent=5 // pred_check
      _
    $region10: #{_lambda_.3} parent=5 // pred_check_branch
      %150 = sbr.rel (%p147) target = $region12
    $region11: #{_lambda_.3} parent=5 // pred_region
      %s151 = ssub.s32 %s10, 1
      // Predicated region
      $region13: #{_lambda_.3} parent=11 // pred_check
        %p152 = pneg %p48
      $region14: #{_lambda_.3} parent=11 // pred_check_branch
        %154 = sbr.rel (%p152) target = $region16
      $region15: #{_lambda_.3} parent=11 // pred_region
        %p155 = scmp.lt.s32.totalorder %s20, 0
        %s156 = scalar_select %p155, %s20, 0
        %s157 = smul.addr %s156, 8
        %s158 = scalar_lea.vmem %s0, %s157
      $region16: #{_lambda_.3} parent=11 // pred_fallthru
        _
      // Predicated region
      $region17: #{_lambda_.3} parent=11 // pred_check
        %p159 = pneg %p69
      $region18: #{_lambda_.3} parent=11 // pred_check_branch
        %161 = sbr.rel (%p159) target = $region20
      $region19: #{_lambda_.3} parent=11 // pred_region
        _
      $region20: #{_lambda_.3} parent=11 // pred_fallthru
        _
      // Predicated region
      $region21: #{_lambda_.3} parent=11 // pred_check
        %p162 = pneg %p90
      $region22: #{_lambda_.3} parent=11 // pred_check_branch
        %164 = sbr.rel (%p162) target = $region24
      $region23: #{_lambda_.3} parent=11 // pred_region
        _
      $region24: #{_lambda_.3} parent=11 // pred_fallthru
        _
      // Predicated region
      $region25: #{_lambda_.3} parent=11 // pred_check
        %p165 = pneg %p111
      $region26: #{_lambda_.3} parent=11 // pred_check_branch
        %167 = sbr.rel (%p165) target = $region28
      $region27: #{_lambda_.3} parent=11 // pred_region
        _
      $region28: #{_lambda_.3} parent=11 // pred_fallthru
        _
    $region12: #{_lambda_.3} parent=5 // pred_fallthru
      _
    %p168 = scmp.lt.s32.totalorder %s10, 2
    // Predicated region
    $region29: #{_lambda_.3} parent=5 // pred_check
      %p169 = pneg %p168
    $region30: #{_lambda_.3} parent=5 // pred_check_branch
      %171 = sbr.rel (%p169) target = $region32
    $region31: #{_lambda_.3} parent=5 // pred_region
      _
    $region32: #{_lambda_.3} parent=5 // pred_fallthru
      _
    %p172 = scmp.le.s32.totalorder 1, %s10
    %p173 = scmp.lt.s32.totalorder %s10, 3
    %p174 = pnand %p172, %p173
    %p175 = pneg %p174
    // Predicated region
    $region33: #{_lambda_.3} parent=5 // pred_check
      _
    $region34: #{_lambda_.3} parent=5 // pred_check_branch
      %177 = sbr.rel (%p174) target = $region36
    $region35: #{_lambda_.3} parent=5 // pred_region
      %s178 = ssub.s32 %s10, 1
      %p179 = scmp.lt.s32.totalorder %s20, 0
      %s180 = scalar_select %p179, %s20, 0
      %s181 = smul.addr %s180, 8
      %s182 = scalar_lea.vmem %s0, %s181
      %p183 = pneg %p48
      %p184 = pneg %p45
      %p185 = pneg %p69
      %p186 = pneg %p66
      %p187 = pneg %p90
      %p188 = pneg %p87
      %p189 = pneg %p111
      %p190 = pneg %p108
      %p191 = pneg %p137
      %p192 = pneg %p134
      %p193 = scmp.lt.s32.totalorder %s20, 0
      %s194 = scalar_select %p193, %s20, 0
      %s195 = smul.addr %s194, 8
      %s196 = scalar_lea.vmem %s4, %s195
      %p197 = scmp.lt.s32.totalorder %s20, 0
      %s198 = scalar_select %p197, %s20, 0
      %s199 = smul.addr %s198, 8
      %s200 = scalar_lea.vmem %s0, %s199
      %p201 = scmp.lt.s32.totalorder %s20, 0
      %s202 = scalar_select %p201, %s20, 0
      %s203 = smul.addr %s202, 8
      %s204 = scalar_lea.vmem %s4, %s203
      %v205 = vld [vmem:[%s1] sm:$0xff]
      %v206 = vld [vmem:[%s1 + $0x8] sm:$0xff]
      %v207 = vld [vmem:[%s200] sm:$0xff]
      %v208 = vld [vmem:[%s200 + $0x8] sm:$0xff]
      %v209 = vld [vmem:[%s200 + $0x10] sm:$0xff]
      %v210 = vld [vmem:[%s200 + $0x18] sm:$0xff]
      %v211 = vld [vmem:[%s200 + $0x20] sm:$0xff]
      %v212 = vld [vmem:[%s200 + $0x28] sm:$0xff]
      %v213 = vld [vmem:[%s200 + $0x30] sm:$0xff]
      %v214 = vld [vmem:[%s200 + $0x38] sm:$0xff]
      %v215 = vld [vmem:[%s200 + $0x40] sm:$0xff]
      %vm216 = vcmask 588800
      %v218 = vsel %vm216, %v205, 0
      %v221 = vsel %vm216, %v206, 0
      %223 = vmatprep.subr.mxu0 0.0
      %224 = vmatpush1.msra.mxu0 0.0
      %225 = vmatprep.subr.mxu0 0.0
      %226 = vmatpush1.msra.mxu0 0.0
      %227 = vmatprep.subr.mxu0 0.0
      %228 = vmatpush1.msra.mxu0 0.0
      %229 = vmatprep.subr.mxu0 0.0
      %230 = vmatpush1.msra.mxu0 0.0
      %231 = vmatprep.subr.mxu0 0.0
      %232 = vmatpush1.msra.mxu0 0.0
      %233 = vmatprep.subr.mxu0 0.0
      %234 = vmatpush1.msra.mxu0 0.0
      %235 = vmatprep.subr.mxu0 0.0
      %236 = vmatpush1.msra.mxu0 0.0
      %237 = vmatprep.subr.mxu0 0.0
      %238 = vmatpush1.msra.mxu0 %v215
      %239 = vmatprep.subr.mxu0 0.0
      %240 = vmatpush1.msra.mxu0 %v214
      %241 = vmatprep.subr.mxu0 0.0
      %242 = vmatpush1.msra.mxu0 %v213
      %243 = vmatprep.subr.mxu0 0.0
      %244 = vmatpush1.msra.mxu0 %v212
      %245 = vmatprep.subr.mxu0 0.0
      %246 = vmatpush1.msra.mxu0 %v211
      %247 = vmatprep.subr.mxu0 0.0
      %248 = vmatpush1.msra.mxu0 %v210
      %249 = vmatprep.subr.mxu0 0.0
      %250 = vmatpush1.msra.mxu0 %v209
      %251 = vmatprep.subr.mxu0 0.0
      %252 = vmatpush1.msra.mxu0 %v208
      %253 = vmatprep.subr.mxu0 0.0
      %254 = vmatpush1.msra.mxu0 %v207
      %255 = vmatprep.subr.mxu0 0.0
      %256 = vmatpush2.msra.mxu0 0.0
      %257 = vmatprep.subr.mxu0 0.0
      %258 = vmatpush2.msra.mxu0 0.0
      %259 = vmatprep.subr.mxu0 0.0
      %260 = vmatpush2.msra.mxu0 0.0
      %261 = vmatprep.subr.mxu0 0.0
      %262 = vmatpush2.msra.mxu0 0.0
      %263 = vmatprep.subr.mxu0 0.0
      %264 = vmatpush2.msra.mxu0 0.0
      %265 = vmatprep.subr.mxu0 0.0
      %266 = vmatpush2.msra.mxu0 0.0
      %267 = vmatprep.subr.mxu0 0.0
      %268 = vmatpush2.msra.mxu0 0.0
      %269 = vmatprep.subr.mxu0 0.0
      %270 = vmatpush2.msra.mxu0 0.0
      %271 = vmatprep.subr.mxu0 0.0
      %272 = vmatpush2.msra.mxu0 0.0
      %273 = vmatprep.subr.mxu0 0.0
      %274 = vmatpush2.msra.mxu0 0.0
      %275 = vmatprep.subr.mxu0 0.0
      %276 = vmatpush2.msra.mxu0 0.0
      %277 = vmatprep.subr.mxu0 0.0
      %278 = vmatpush2.msra.mxu0 0.0
      %279 = vmatprep.subr.mxu0 0.0
      %280 = vmatpush2.msra.mxu0 0.0
      %281 = vmatprep.subr.mxu0 0.0
      %282 = vmatpush2.msra.mxu0 0.0
      %283 = vmatprep.subr.mxu0 0.0
      %284 = vmatpush2.msra.mxu0 0.0
      %285 = vmatprep.subr.mxu0 0.0
      %286 = vmatpush2.msra.mxu0 0.0
      %287 = vmatprep.mubr.f32.mxu0 0.0
      %288 = vmatmul.mubr.f32.gmra.mxu0 %v218
      %v289 = vpop.f32.mrf.mxu0
      %v290 = vadd.f32 0.0, %v289
      %v291 = vpop.f32.mrf.mxu0
      %292 = vmatprep.mubr.f32.mxu0 0.0
      %293 = vmatmul.mubr.f32.gmra.mxu0 %v221
      %v294 = vpop.f32.mrf.mxu0
      %v295 = vadd.f32 0.0, %v294
      %v296 = vpop.f32.mrf.mxu0
      %297 = vdwg.mxu0
      %p298 = scmp.eq.s32.totalorder %s19, 0
      %p299 = scmp.eq.s32.totalorder %s20, 0
      %p300 = pnand %p298, %p299
      %p301 = pneg %p300
      // Predicated region
      $region37: #{_lambda_.3} parent=35 // pred_check
        _
      $region38: #{_lambda_.3} parent=35 // pred_check_branch
        %303 = sbr.rel (%p300) target = $region40
      $region39: #{_lambda_.3} parent=35 // pred_region
        %vm304 = vcmask 7168
        %305 = vst.msk [vmem:[#allocation2] sm:$0xff] %vm304, 0.0
        %306 = vst.msk [vmem:[#allocation2 + $0x8] sm:$0xff] %vm304, 0.0
        %307 = vst.msk [vmem:[#allocation3] sm:$0xff] %vm304, 0.0
        %308 = vst.msk [vmem:[#allocation3 + $0x8] sm:$0xff] %vm304, 0.0
      $region40: #{_lambda_.3} parent=35 // pred_fallthru
        _
      // Predicated region
      $region41: #{_lambda_.3} parent=35 // pred_check
        %p309 = pneg %p298
      $region42: #{_lambda_.3} parent=35 // pred_check_branch
        %311 = sbr.rel (%p309) target = $region44
      $region43: #{_lambda_.3} parent=35 // pred_region
        %v312 = vld [vmem:[#allocation2] sm:$0xff]
        %v313 = vld [vmem:[#allocation2 + $0x8] sm:$0xff]
        %314 = vadd.xlane.f32.xlu0 %v290
        %v315 = vpop.xlane.xlu0 %314
        %316 = vadd.xlane.f32.xlu0 %v295
        %v317 = vpop.xlane.xlu0 %316
        %v318 = vadd.f32 %v312, %v315
        %v319 = vadd.f32 %v313, %v317
        %vm320 = vcmask 7168
        %321 = vst.msk [vmem:[#allocation2] sm:$0xff] %vm320, %v318
        %322 = vst.msk [vmem:[#allocation2 + $0x8] sm:$0xff] %vm320, %v319
        %v323 = vld [vmem:[#allocation3] sm:$0xff]
        %v324 = vld [vmem:[#allocation3 + $0x8] sm:$0xff]
        %v325 = vmul.f32 %v290, %v290
        %v326 = vmul.f32 %v295, %v295
        %327 = vadd.xlane.f32.xlu0 %v325
        %v328 = vpop.xlane.xlu0 %327
        %329 = vadd.xlane.f32.xlu0 %v326
        %v330 = vpop.xlane.xlu0 %329
        %v331 = vadd.f32 %v323, %v328
        %v332 = vadd.f32 %v324, %v330
        %333 = vst.msk [vmem:[#allocation3] sm:$0xff] %vm320, %v331
        %334 = vst.msk [vmem:[#allocation3 + $0x8] sm:$0xff] %vm320, %v332
      $region44: #{_lambda_.3} parent=35 // pred_fallthru
        _
      %p335 = scmp.eq.s32.totalorder %s19, 1
      %p336 = pnand %p335, %p299
      %p337 = pneg %p336
      // Predicated region
      $region45: #{_lambda_.3} parent=35 // pred_check
        _
      $region46: #{_lambda_.3} parent=35 // pred_check_branch
        %339 = sbr.rel (%p336) target = $region48
      $region47: #{_lambda_.3} parent=35 // pred_region
        %v340 = vld [vmem:[#allocation2] sm:$0xff]
        %v341 = vld [vmem:[#allocation2 + $0x8] sm:$0xff]
        %v342 = vmul.f32 %v340, 0.0078125
        %v343 = vmul.f32 %v341, 0.0078125
        %v344 = vld [vmem:[#allocation3] sm:$0xff]
        %v345 = vld [vmem:[#allocation3 + $0x8] sm:$0xff]
        %v346 = vmul.f32 %v344, 0.0078125
        %v347 = vmul.f32 %v345, 0.0078125
        %v348 = vmul.f32 %v342, %v342
        %v349 = vmul.f32 %v343, %v343
        %v350 = vsub.f32 %v346, %v348
        %v351 = vsub.f32 %v347, %v349
        %v352 = vmax.f32 %v350, 0.0
        %v353 = vmax.f32 %v351, 0.0
        %v354 = vadd.f32 %v352, 1e-05
        %v355 = vadd.f32 %v353, 1e-05
        %v356 = vrsqrt.pop %v354
        %v357 = vrsqrt.pop %v355
        %v358 = vld [vmem:[%s2] sm:$0xff]
        %v359 = vld [vmem:[%s2 + $0x8] sm:$0xff]
        %v360 = vmul.f32 %v358, %v356
        %v361 = vmul.f32 %v359, %v357
        %vm362 = vcmask 7168
        %363 = vst.msk [vmem:[#allocation4] sm:$0xff] %vm362, %v360
        %364 = vst.msk [vmem:[#allocation4 + $0x8] sm:$0xff] %vm362, %v361
        %v365 = vld [vmem:[%s3] sm:$0xff]
        %v366 = vld [vmem:[%s3 + $0x8] sm:$0xff]
        %v367 = vmul.f32 %v342, %v360
        %v368 = vmul.f32 %v343, %v361
        %v369 = vsub.f32 %v365, %v367
        %v370 = vsub.f32 %v366, %v368
        %371 = vst.msk [vmem:[#allocation5] sm:$0xff] %vm362, %v369
        %372 = vst.msk [vmem:[#allocation5 + $0x8] sm:$0xff] %vm362, %v370
      $region48: #{_lambda_.3} parent=35 // pred_fallthru
        _
      // Predicated region
      $region49: #{_lambda_.3} parent=35 // pred_check
        %p373 = pneg %p335
      $region50: #{_lambda_.3} parent=35 // pred_check_branch
        %375 = sbr.rel (%p373) target = $region52
      $region51: #{_lambda_.3} parent=35 // pred_region
        %v376 = vld [vmem:[#allocation4] sm:$0xff]
        %v377 = vld [vmem:[#allocation4 + $0x8] sm:$0xff]
        %379 = vset.pattern.permute.xlu0 0
        %380 = vperm.xlu0 %379, %v376
        %v381 = vpop.permute.xlu0 %380
        %384 = vset.pattern.permute.xlu0 0
        %385 = vperm.xlu0 %384, %v377
        %v386 = vpop.permute.xlu0 %385
        %v388 = vmul.f32 %v290, %v381
        %v389 = vmul.f32 %v295, %v386
        %v390 = vld [vmem:[#allocation5] sm:$0xff]
        %v391 = vld [vmem:[#allocation5 + $0x8] sm:$0xff]
        %393 = vset.pattern.permute.xlu0 0
        %394 = vperm.xlu0 %393, %v390
        %v395 = vpop.permute.xlu0 %394
        %398 = vset.pattern.permute.xlu0 0
        %399 = vperm.xlu0 %398, %v391
        %v400 = vpop.permute.xlu0 %399
        %v402 = vadd.f32 %v388, %v395
        %v403 = vadd.f32 %v389, %v400
        %v404 = vmax.f32 %v402, 0.0
        %v405 = vmax.f32 %v403, 0.0
        %406 = vst [vmem:[%s204] sm:$0xff] %v404
        %407 = vst [vmem:[%s204 + $0x8] sm:$0xff] %v405
      $region52: #{_lambda_.3} parent=35 // pred_fallthru
        _
      %p408 = scmp.lt.s32.totalorder %s20, 0
      %s409 = scalar_select %p408, %s20, 0
      %s410 = smul.addr %s409, 8
      %s411 = scalar_lea.vmem %s4, %s410
      // Predicated region
      $region53: #{_lambda_.3} parent=35 // pred_check
        %p412 = pneg %p134
      $region54: #{_lambda_.3} parent=35 // pred_check_branch
        %414 = sbr.rel (%p412) target = $region56
      $region55: #{_lambda_.3} parent=35 // pred_region
        _
      $region56: #{_lambda_.3} parent=35 // pred_fallthru
        _
      // Predicated region
      $region57: #{_lambda_.3} parent=35 // pred_check
        %p415 = pneg %p134
      $region58: #{_lambda_.3} parent=35 // pred_check_branch
        %417 = sbr.rel (%p415) target = $region60
      $region59: #{_lambda_.3} parent=35 // pred_region
        %p418 = scmp.lt.s32.totalorder %s20, 0
        %s419 = scalar_select %p418, %s20, 0
        %s420 = smul.addr %s419, 8
        %s421 = scalar_lea.vmem %s4, %s420
      $region60: #{_lambda_.3} parent=35 // pred_fallthru
        _
    $region36: #{_lambda_.3} parent=5 // pred_fallthru
      _
    %p422 = scmp.le.s32.totalorder 2, %s10
    // Predicated region
    $region61: #{_lambda_.3} parent=5 // pred_check
      %p423 = pneg %p422
    $region62: #{_lambda_.3} parent=5 // pred_check_branch
      %425 = sbr.rel (%p423) target = $region64
    $region63: #{_lambda_.3} parent=5 // pred_region
      %s426 = ssub.s32 %s10, 2
    $region64: #{_lambda_.3} parent=5 // pred_fallthru
      _
  $region6: #{_lambda_.3} parent=0 // loop_footer
    %s14 = sadd.s32 1, %s10
  $region7: #{_lambda_.3} parent=0 // loop_footer_branch
    %9 = sbr.rel target = $region3
  $region8: #{_lambda_.3} parent=0 // loop_exit
    _

</llo_original>
